<compile_context>
chip_gen: v6e
topology: v6e:2x2x1
jax: 0.10.0
libtpu: 0.0.40
codegen_flags: <defaults>
</compile_context>

<pallas_src>
import numpy as np
import jax
import jax.numpy as jnp
from jax.experimental import pallas as pl
from jax.experimental.pallas import tpu as pltpu


N_LAYERS = 6       # 5 trunk layers + 1 fused head layer
HIDDEN_PAD = 128   # every layer width zero-padded to 128 (lane-dense)


# ----------------------------------------------------------------------------
# Kernel: whole ImputationNet forward for one batch tile.
# ----------------------------------------------------------------------------
def imputation_kernel(x_ref, w_ref, b_ref, out_ref):
    """
    x_ref:   [TM, in_w]      f32 input activations (in_w = real input width)
    w_ref:   [6, 128, 128]   bf16 zero-padded weights (layer i at w_ref[i])
    b_ref:   [6, 1, 128]     f32 zero-padded (BN-folded) biases
    out_ref: [TM, 128]       f32 head logits, lane-dense (cols >= n_heads are 0)
    """
    in_w = x_ref.shape[-1]
    h = x_ref[...].astype(jnp.bfloat16)

    # Layer 0: [TM, in_w] @ [in_w, 128]  (static slice of the padded weight).
    w0 = w_ref[0][:in_w, :]
    y = jnp.dot(h, w0, preferred_element_type=jnp.float32) + b_ref[0]
    h = jnp.maximum(y, 0.0).astype(jnp.bfloat16)

    # Layers 1..4: 128->64->32->64->128, all padded to 128 wide; padded
    # columns stay exactly zero (zero weight cols + zero bias -> relu(0)=0).
    # Dropout(p=0.2) after layer 2 is identity in eval mode.
    for i in range(1, 5):
        y = jnp.dot(h, w_ref[i], preferred_element_type=jnp.float32) + b_ref[i]
        h = jnp.maximum(y, 0.0).astype(jnp.bfloat16)

    # Fused heads: regressor + binary classifier + all classifiers, one matmul.
    out_ref[...] = (
        jnp.dot(h, w_ref[5], preferred_element_type=jnp.float32) + b_ref[5]
    )


def _round_up(n, m):
    return (n + m - 1) // m * m


def run_imputation_net(x, w_pack, b_pack, *, tm=None):
    """x: [B, in_w] f32; w_pack: [6,128,128] bf16; b_pack: [6,1,128] f32.
    Returns [B, 128] f32 head logits (columns >= n_heads_total are zero)."""
    B, in_w = x.shape
    assert in_w <= HIDDEN_PAD
    if tm is None:
        tm = min(256, _round_up(B, 8))
    b_pad = _round_up(B, tm)
    if b_pad != B:
        x = jnp.pad(x, ((0, b_pad - B), (0, 0)))

    heads = pl.pallas_call(
        imputation_kernel,
        out_shape=jax.ShapeDtypeStruct((b_pad, HIDDEN_PAD), jnp.float32),
        grid=(b_pad // tm,),
        in_specs=[
            pl.BlockSpec((tm, in_w), lambda i: (i, 0)),
            # Params: block index 0 every step -> VMEM-resident, DMA'd once.
            pl.BlockSpec((N_LAYERS, HIDDEN_PAD, HIDDEN_PAD), lambda i: (0, 0, 0)),
            pl.BlockSpec((N_LAYERS, 1, HIDDEN_PAD), lambda i: (0, 0, 0)),
        ],
        out_specs=pl.BlockSpec((tm, HIDDEN_PAD), lambda i: (i, 0)),
        compiler_params=pltpu.CompilerParams(
            dimension_semantics=("parallel",)),
    )(x, w_pack, b_pack)
    return heads[:B]


# ----------------------------------------------------------------------------
# Parameter construction (deterministic, synthetic) + BN folding + packing.
# ----------------------------------------------------------------------------
def fold_bn_into_linear(w, b, gamma, beta, mean, var, eps=1e-5):
    """Linear(x@W+b) followed by eval-mode BatchNorm1d -> single affine."""
    scale = gamma / jnp.sqrt(var + eps)            # [out]
    return (w * scale[None, :]).astype(jnp.float32), \
           ((b - mean) * scale + beta).astype(jnp.float32)


def pack_params(layer_params):
    """layer_params: 6 x (W [fi,fo] f32, b [fo] f32) -> packed (bf16, f32)."""
    ws, bs = [], []
    for w, b in layer_params:
        fi, fo = w.shape
        assert fi <= HIDDEN_PAD and fo <= HIDDEN_PAD
        ws.append(jnp.zeros((HIDDEN_PAD, HIDDEN_PAD), jnp.float32)
                  .at[:fi, :fo].set(w))
        bs.append(jnp.zeros((HIDDEN_PAD,), jnp.float32)
                  .at[:fo].set(b.reshape(-1)))
    w_pack = jnp.stack(ws).astype(jnp.bfloat16)              # [6,128,128]
    b_pack = jnp.stack(bs).reshape(N_LAYERS, 1, HIDDEN_PAD)  # [6,1,128]
    return w_pack, b_pack


def make_linear_bn(key, fan_in, fan_out):
    k = jax.random.split(key, 6)
    w = jax.random.normal(k[0], (fan_in, fan_out), jnp.float32) / jnp.sqrt(fan_in)
    b = jax.random.normal(k[1], (fan_out,), jnp.float32) * 0.05
    gamma = 1.0 + 0.05 * jax.random.normal(k[2], (fan_out,), jnp.float32)
    beta = 0.05 * jax.random.normal(k[3], (fan_out,), jnp.float32)
    mean = 0.05 * jax.random.normal(k[4], (fan_out,), jnp.float32)
    var = 1.0 + 0.1 * jnp.abs(jax.random.normal(k[5], (fan_out,), jnp.float32))
    return fold_bn_into_linear(w, b, gamma, beta, mean, var)


def make_linear(key, fan_in, fan_out):
    k0, k1 = jax.random.split(key)
    w = jax.random.normal(k0, (fan_in, fan_out), jnp.float32) / jnp.sqrt(fan_in)
    b = jax.random.normal(k1, (fan_out,), jnp.float32) * 0.05
    return w.astype(jnp.float32), b.astype(jnp.float32)


def reference_forward(x, layer_params):
    """Pure-JAX reference with the same bf16-operand / f32-accum arithmetic."""
    h = x.astype(jnp.bfloat16)
    for w, b in layer_params[:-1]:
        y = jnp.dot(h, w.astype(jnp.bfloat16),
                    preferred_element_type=jnp.float32) + b
        h = jnp.maximum(y, 0.0).astype(jnp.bfloat16)
    w, b = layer_params[-1]
    return jnp.dot(h, w.astype(jnp.bfloat16),
                   preferred_element_type=jnp.float32) + b


if __name__ == "__main__":
    # ---------------- synthetic config (protocol.get_feature_len stand-in) ---
    data_version = 1
    feature_len = {"luke": 10, "phys": 8, "bio": 6, "onehot": 4, "angio": 3,
                   "onset": 1}
    target_info = {
        "data_version": data_version,
        "regression_cols": ["reg_a", "reg_b", "reg_c"],          # 3 outputs
        "binary_cls_cols": ["bin_a", "bin_b"],                   # 2 outputs
        "cls_cols_dict": {"onset": 2, "mrs": 7},                 # onset forced to 2
    }

    names = list(feature_len.keys())
    feature_arrangement, acc = {}, 0
    for n in names:
        feature_arrangement[n] = (acc, acc + feature_len[n])
        acc += feature_len[n]
    total_features = acc                          # 32

    feature_names = ["luke", "phys", "bio", "onehot", "angio"]
    input_len = sum(feature_len[k] for k in feature_names)
    if data_version == 1:
        feature_names += ["onset"]
        input_len += feature_len["onset"]         # 32

    B = 8
    key = jax.random.PRNGKey(0)
    keys = jax.random.split(key, 16)
    x = jax.random.normal(keys[0], (B, total_features), jnp.float32)

    # ---------------- feature-group gather (skipped when it is an identity) --
    cols = np.concatenate([np.arange(*feature_arrangement[k])
                           for k in feature_names])
    if np.array_equal(cols, np.arange(cols.size)):
        input_raw = x[:, :cols.size]              # identity reshuffle -> free
    else:
        input_raw = jnp.take(x, jnp.asarray(cols), axis=1)

    # ---------------- trunk params (Linear + folded BN), 5 layers ------------
    trunk_dims = [(input_len, 128), (128, 64), (64, 32), (32, 64), (64, 128)]
    trunk_params = [make_linear_bn(keys[1 + i], fi, fo)
                    for i, (fi, fo) in enumerate(trunk_dims)]

    # ---------------- head params, concatenated into one fused head layer ----
    n_reg = len(target_info["regression_cols"])
    n_bin = len(target_info["binary_cls_cols"])
    cls_sizes = [(t, 2 if t == "onset" else n)
                 for t, n in target_info["cls_cols_dict"].items()]

    head_ws, head_bs = [], []
    w, b = make_linear(keys[7], 128, n_reg); head_ws.append(w); head_bs.append(b)
    w, b = make_linear(keys[8], 128, n_bin); head_ws.append(w); head_bs.append(b)
    for i, (t_name, n_out) in enumerate(cls_sizes):
        w, b = make_linear(keys[9 + i], 128, n_out)
        head_ws.append(w); head_bs.append(b)
    head_w = jnp.concatenate(head_ws, axis=1)     # [128, n_total]
    head_b = jnp.concatenate(head_bs, axis=0)     # [n_total]
    n_total = head_w.shape[1]                     # 14
    assert n_total <= HIDDEN_PAD

    layer_params = list(trunk_params) + [(head_w, head_b)]
    w_pack, b_pack = pack_params(layer_params)    # 2 packed param arrays

    # ---------------- run Pallas kernel --------------------------------------
    heads_padded = run_imputation_net(input_raw, w_pack, b_pack)  # [B, 128]
    heads_padded = jax.block_until_ready(heads_padded)

    regression_logits = heads_padded[:, :n_reg]
    binary_cls_logits = heads_padded[:, n_reg:n_reg + n_bin]
    off = n_reg + n_bin
    cls_logits = []
    for t_name, n_out in cls_sizes:
        cls_logits.append(heads_padded[:, off:off + n_out]); off += n_out
    mu_sigma = None
    curve_params = None
    result = (regression_logits, binary_cls_logits, cls_logits, mu_sigma,
              curve_params)

    # ---------------- validate -----------------------------------------------
    ref = reference_forward(input_raw, layer_params)              # [B, 14]
    np.testing.assert_allclose(np.asarray(heads_padded[:, :n_total]),
                               np.asarray(ref), rtol=2e-2, atol=2e-2)
    assert regression_logits.shape == (B, n_reg)
    assert binary_cls_logits.shape == (B, n_bin)
    assert [c.shape for c in cls_logits] == [(B, 2), (B, 7)]
    assert bool(jnp.all(jnp.isfinite(heads_padded)))
    print("KERNEL_OK")
</pallas_src>

<mosaic_0001>
module attributes {stable_mosaic.version = 11 : i64} {
  func.func @imputation_kernel(%arg0: i32, %arg1: memref<8x32xf32, #tpu.memory_space<vmem>>, %arg2: memref<6x128x128xbf16, #tpu.memory_space<vmem>>, %arg3: memref<6x1x128xf32, #tpu.memory_space<vmem>>, %arg4: memref<8x128xf32, #tpu.memory_space<vmem>>) attributes {dimension_semantics = [#tpu.dimension_semantics<parallel>], iteration_bounds = array<i64: 1>, scalar_prefetch = 0 : i64, scratch_operands = 0 : i64, tpu.core_type = #tpu.core_type<tc>, window_params = [{transform_indices = @transform_0, window_bounds = array<i64: 8, 32>}, {pipeline_mode = #tpu.pipeline_mode<synchronous>, transform_indices = @transform_1, window_bounds = array<i64: 6, 128, 128>}, {pipeline_mode = #tpu.pipeline_mode<synchronous>, transform_indices = @transform_2, window_bounds = array<i64: 6, 1, 128>}, {transform_indices = @transform_3, window_bounds = array<i64: 8, 128>}]} {
    %c0 = arith.constant 0 : index
    %c0_0 = arith.constant 0 : index
    %0 = vector.load %arg1[%c0, %c0_0] : memref<8x32xf32, #tpu.memory_space<vmem>>, vector<8x32xf32>
    %1 = arith.truncf %0 : vector<8x32xf32> to vector<8x32xbf16>
    %c0_1 = arith.constant 0 : index
    %c0_2 = arith.constant 0 : index
    %c0_3 = arith.constant 0 : index
    %2 = vector.load %arg2[%c0_1, %c0_2, %c0_3] : memref<6x128x128xbf16, #tpu.memory_space<vmem>>, vector<1x128x128xbf16>
    %3 = vector.shape_cast %2 : vector<1x128x128xbf16> to vector<128x128xbf16>
    %4 = vector.extract_strided_slice %3 {offsets = [0, 0], sizes = [32, 128], strides = [1, 1]} : vector<128x128xbf16> to vector<32x128xbf16>
    %cst = arith.constant dense<0.000000e+00> : vector<8x128xf32>
    %5 = tpu.matmul %1, %4, %cst {dimension_numbers = #tpu.dot_dimension_numbers<[1], [0], [0], [1], [0, 0, 1, 1], [], []>} : vector<8x32xbf16>, vector<32x128xbf16>, vector<8x128xf32> -> vector<8x128xf32>
    %c0_4 = arith.constant 0 : index
    %c0_5 = arith.constant 0 : index
    %c0_6 = arith.constant 0 : index
    %6 = vector.load %arg3[%c0_4, %c0_5, %c0_6] : memref<6x1x128xf32, #tpu.memory_space<vmem>>, vector<1x1x128xf32>
    %7 = vector.shape_cast %6 : vector<1x1x128xf32> to vector<1x128xf32>
    %8 = vector.broadcast %7 : vector<1x128xf32> to vector<8x128xf32>
    %9 = arith.addf %5, %8 : vector<8x128xf32>
    %cst_7 = arith.constant 0.000000e+00 : f32
    %10 = vector.broadcast %cst_7 : f32 to vector<8x128xf32>
    %11 = arith.maximumf %9, %10 : vector<8x128xf32>
    %12 = arith.truncf %11 : vector<8x128xf32> to vector<8x128xbf16>
    %c1 = arith.constant 1 : index
    %c0_8 = arith.constant 0 : index
    %c0_9 = arith.constant 0 : index
    %13 = vector.load %arg2[%c1, %c0_8, %c0_9] : memref<6x128x128xbf16, #tpu.memory_space<vmem>>, vector<1x128x128xbf16>
    %14 = vector.shape_cast %13 : vector<1x128x128xbf16> to vector<128x128xbf16>
    %cst_10 = arith.constant dense<0.000000e+00> : vector<8x128xf32>
    %15 = tpu.matmul %12, %14, %cst_10 {dimension_numbers = #tpu.dot_dimension_numbers<[1], [0], [0], [1], [0, 0, 1, 1], [], []>} : vector<8x128xbf16>, vector<128x128xbf16>, vector<8x128xf32> -> vector<8x128xf32>
    %c1_11 = arith.constant 1 : index
    %c0_12 = arith.constant 0 : index
    %c0_13 = arith.constant 0 : index
    %16 = vector.load %arg3[%c1_11, %c0_12, %c0_13] : memref<6x1x128xf32, #tpu.memory_space<vmem>>, vector<1x1x128xf32>
    %17 = vector.shape_cast %16 : vector<1x1x128xf32> to vector<1x128xf32>
    %18 = vector.broadcast %17 : vector<1x128xf32> to vector<8x128xf32>
    %19 = arith.addf %15, %18 : vector<8x128xf32>
    %cst_14 = arith.constant 0.000000e+00 : f32
    %20 = vector.broadcast %cst_14 : f32 to vector<8x128xf32>
    %21 = arith.maximumf %19, %20 : vector<8x128xf32>
    %22 = arith.truncf %21 : vector<8x128xf32> to vector<8x128xbf16>
    %c2 = arith.constant 2 : index
    %c0_15 = arith.constant 0 : index
    %c0_16 = arith.constant 0 : index
    %23 = vector.load %arg2[%c2, %c0_15, %c0_16] : memref<6x128x128xbf16, #tpu.memory_space<vmem>>, vector<1x128x128xbf16>
    %24 = vector.shape_cast %23 : vector<1x128x128xbf16> to vector<128x128xbf16>
    %cst_17 = arith.constant dense<0.000000e+00> : vector<8x128xf32>
    %25 = tpu.matmul %22, %24, %cst_17 {dimension_numbers = #tpu.dot_dimension_numbers<[1], [0], [0], [1], [0, 0, 1, 1], [], []>} : vector<8x128xbf16>, vector<128x128xbf16>, vector<8x128xf32> -> vector<8x128xf32>
    %c2_18 = arith.constant 2 : index
    %c0_19 = arith.constant 0 : index
    %c0_20 = arith.constant 0 : index
    %26 = vector.load %arg3[%c2_18, %c0_19, %c0_20] : memref<6x1x128xf32, #tpu.memory_space<vmem>>, vector<1x1x128xf32>
    %27 = vector.shape_cast %26 : vector<1x1x128xf32> to vector<1x128xf32>
    %28 = vector.broadcast %27 : vector<1x128xf32> to vector<8x128xf32>
    %29 = arith.addf %25, %28 : vector<8x128xf32>
    %cst_21 = arith.constant 0.000000e+00 : f32
    %30 = vector.broadcast %cst_21 : f32 to vector<8x128xf32>
    %31 = arith.maximumf %29, %30 : vector<8x128xf32>
    %32 = arith.truncf %31 : vector<8x128xf32> to vector<8x128xbf16>
    %c3 = arith.constant 3 : index
    %c0_22 = arith.constant 0 : index
    %c0_23 = arith.constant 0 : index
    %33 = vector.load %arg2[%c3, %c0_22, %c0_23] : memref<6x128x128xbf16, #tpu.memory_space<vmem>>, vector<1x128x128xbf16>
    %34 = vector.shape_cast %33 : vector<1x128x128xbf16> to vector<128x128xbf16>
    %cst_24 = arith.constant dense<0.000000e+00> : vector<8x128xf32>
    %35 = tpu.matmul %32, %34, %cst_24 {dimension_numbers = #tpu.dot_dimension_numbers<[1], [0], [0], [1], [0, 0, 1, 1], [], []>} : vector<8x128xbf16>, vector<128x128xbf16>, vector<8x128xf32> -> vector<8x128xf32>
    %c3_25 = arith.constant 3 : index
    %c0_26 = arith.constant 0 : index
    %c0_27 = arith.constant 0 : index
    %36 = vector.load %arg3[%c3_25, %c0_26, %c0_27] : memref<6x1x128xf32, #tpu.memory_space<vmem>>, vector<1x1x128xf32>
    %37 = vector.shape_cast %36 : vector<1x1x128xf32> to vector<1x128xf32>
    %38 = vector.broadcast %37 : vector<1x128xf32> to vector<8x128xf32>
    %39 = arith.addf %35, %38 : vector<8x128xf32>
    %cst_28 = arith.constant 0.000000e+00 : f32
    %40 = vector.broadcast %cst_28 : f32 to vector<8x128xf32>
    %41 = arith.maximumf %39, %40 : vector<8x128xf32>
    %42 = arith.truncf %41 : vector<8x128xf32> to vector<8x128xbf16>
    %c4 = arith.constant 4 : index
    %c0_29 = arith.constant 0 : index
    %c0_30 = arith.constant 0 : index
    %43 = vector.load %arg2[%c4, %c0_29, %c0_30] : memref<6x128x128xbf16, #tpu.memory_space<vmem>>, vector<1x128x128xbf16>
    %44 = vector.shape_cast %43 : vector<1x128x128xbf16> to vector<128x128xbf16>
    %cst_31 = arith.constant dense<0.000000e+00> : vector<8x128xf32>
    %45 = tpu.matmul %42, %44, %cst_31 {dimension_numbers = #tpu.dot_dimension_numbers<[1], [0], [0], [1], [0, 0, 1, 1], [], []>} : vector<8x128xbf16>, vector<128x128xbf16>, vector<8x128xf32> -> vector<8x128xf32>
    %c4_32 = arith.constant 4 : index
    %c0_33 = arith.constant 0 : index
    %c0_34 = arith.constant 0 : index
    %46 = vector.load %arg3[%c4_32, %c0_33, %c0_34] : memref<6x1x128xf32, #tpu.memory_space<vmem>>, vector<1x1x128xf32>
    %47 = vector.shape_cast %46 : vector<1x1x128xf32> to vector<1x128xf32>
    %48 = vector.broadcast %47 : vector<1x128xf32> to vector<8x128xf32>
    %49 = arith.addf %45, %48 : vector<8x128xf32>
    %cst_35 = arith.constant 0.000000e+00 : f32
    %50 = vector.broadcast %cst_35 : f32 to vector<8x128xf32>
    %51 = arith.maximumf %49, %50 : vector<8x128xf32>
    %52 = arith.truncf %51 : vector<8x128xf32> to vector<8x128xbf16>
    %c5 = arith.constant 5 : index
    %c0_36 = arith.constant 0 : index
    %c0_37 = arith.constant 0 : index
    %53 = vector.load %arg2[%c5, %c0_36, %c0_37] : memref<6x128x128xbf16, #tpu.memory_space<vmem>>, vector<1x128x128xbf16>
    %54 = vector.shape_cast %53 : vector<1x128x128xbf16> to vector<128x128xbf16>
    %cst_38 = arith.constant dense<0.000000e+00> : vector<8x128xf32>
    %55 = tpu.matmul %52, %54, %cst_38 {dimension_numbers = #tpu.dot_dimension_numbers<[1], [0], [0], [1], [0, 0, 1, 1], [], []>} : vector<8x128xbf16>, vector<128x128xbf16>, vector<8x128xf32> -> vector<8x128xf32>
    %c5_39 = arith.constant 5 : index
    %c0_40 = arith.constant 0 : index
    %c0_41 = arith.constant 0 : index
    %56 = vector.load %arg3[%c5_39, %c0_40, %c0_41] : memref<6x1x128xf32, #tpu.memory_space<vmem>>, vector<1x1x128xf32>
    %57 = vector.shape_cast %56 : vector<1x1x128xf32> to vector<1x128xf32>
    %58 = vector.broadcast %57 : vector<1x128xf32> to vector<8x128xf32>
    %59 = arith.addf %55, %58 : vector<8x128xf32>
    %c0_42 = arith.constant 0 : index
    %c0_43 = arith.constant 0 : index
    %60 = vector.load %arg4[%c0_42, %c0_43] : memref<8x128xf32, #tpu.memory_space<vmem>>, vector<8x128xf32>
    tpu.vector_store %arg4[%c0_42, %c0_43], %59 {strides = array<i32>} : memref<8x128xf32, #tpu.memory_space<vmem>>, vector<8x128xf32>,
    return
  }
  func.func @transform_0(%arg0: i32) -> (i32, i32) {
    %c0_i32 = arith.constant 0 : i32
    %c0_i32_0 = arith.constant 0 : i32
    return %arg0, %c0_i32 : i32, i32
  }
  func.func @transform_1(%arg0: i32) -> (i32, i32, i32) {
    %c0_i32 = arith.constant 0 : i32
    %c0_i32_0 = arith.constant 0 : i32
    %c0_i32_1 = arith.constant 0 : i32
    %c0_i32_2 = arith.constant 0 : i32
    return %c0_i32, %c0_i32_0, %c0_i32_1 : i32, i32, i32
  }
  func.func @transform_2(%arg0: i32) -> (i32, i32, i32) {
    %c0_i32 = arith.constant 0 : i32
    %c0_i32_0 = arith.constant 0 : i32
    %c0_i32_1 = arith.constant 0 : i32
    %c0_i32_2 = arith.constant 0 : i32
    return %c0_i32, %c0_i32_0, %c0_i32_1 : i32, i32, i32
  }
  func.func @transform_3(%arg0: i32) -> (i32, i32) {
    %c0_i32 = arith.constant 0 : i32
    %c0_i32_0 = arith.constant 0 : i32
    return %arg0, %c0_i32 : i32, i32
  }
}

</mosaic_0001>

<llo_original>
// kernel: tpu_custom_call.1
$region0: #{tpu_custom_call.1}
  #allocation0 [shape = 'u32[]', space=smem, size = 0x4, offset = 0x4, fixed_abs, tag = 'smem constant byte address 0x4 - core index']
  #allocation1 [shape = 'u32[144,128]{1,0:T(1,128)}', space=vmem, size = 0x12000, scoped, tag = 'internal scratch']
  %s0 = inlined_call_operand.hbm [shape: f32[8,32], index: 0, kind: input, shape index: {}]
  %s1 = inlined_call_operand.hbm [shape: bf16[6,128,128], index: 1, kind: input, shape index: {}]
  %s2 = inlined_call_operand.hbm [shape: f32[6,1,128], index: 2, kind: input, shape index: {}]
  %s3 = inlined_call_operand.hbm [shape: f32[8,128], index: 3, kind: output, shape index: {}]
  %s4 = sld [smem:[#allocation0]]
  $region34: #{tpu_custom_call.1} parent=0
    _
  %s6 = ssub.s32 1, %s4
  %s7 = scalar_select 0, %s6, %s4
  $region1: #{tpu_custom_call.1} parent=0
    #allocation2 [shape = 'u8[4096]{0}', space=vmem, size = 0x1000, scoped, tag = 'input window, operand 0, single buffered']
    #allocation3 [shape = 's32[1]{0}', space=sflag, size = 0x4, scoped, tag = 'scoped memory for tpu_custom_call.1']
    #allocation4 [shape = 's32[1]{0}', space=sflag, size = 0x4, scoped, tag = 'scoped memory for tpu_custom_call.1']
    #allocation5 [shape = 'u8[196608]{0}', space=vmem, size = 0x30000, scoped, tag = 'input window, operand 1, single buffered']
    #allocation6 [shape = 's32[1]{0}', space=sflag, size = 0x4, scoped, tag = 'scoped memory for tpu_custom_call.1']
    #allocation7 [shape = 'u8[3072]{0}', space=vmem, size = 0xc00, scoped, tag = 'input window, operand 2, single buffered']
    #allocation8 [shape = 'u8[4096]{0}', space=vmem, size = 0x1000, scoped, tag = 'output window, operand 0, single buffered']
    %8 = vsyncpa [#allocation3], 0
    %9 = vsyncpa [#allocation6], 0
    %10 = vsyncpa [#allocation4], 0
    // Predicated region
    $region2: #{tpu_custom_call.1} parent=1 // pred_check
      _
    $region3: #{tpu_custom_call.1} parent=1 // pred_check_branch
      %12 = sbr.rel (0) target = $region5
    $region4: #{tpu_custom_call.1} parent=1 // pred_region
      %s14 = ssub.s32 128, 128
      %15 = vsyncadd [#allocation3], %s14
      %s17 = sshll.u32 [#allocation2], 4
      %s18 = int_to_ptr.vmem [resolvable:$true] %s17
      %20 = dma.hbm_to_vmem [thread:$0]  %s0, 128, %s18, [#allocation3]
    $region5: #{tpu_custom_call.1} parent=1 // pred_fallthru
      _
    // Predicated region
    $region6: #{tpu_custom_call.1} parent=1 // pred_check
      _
    $region7: #{tpu_custom_call.1} parent=1 // pred_check_branch
      %22 = sbr.rel (0) target = $region9
    $region8: #{tpu_custom_call.1} parent=1 // pred_region
      %s24 = ssub.s32 6144, 6144
      %25 = vsyncadd [#allocation6], %s24
      %s26 = sshll.u32 [#allocation5], 4
      %s27 = int_to_ptr.vmem [resolvable:$true] %s26
      %32 = dma.hbm_to_vmem [thread:$0]  %s1, 6144, %s27, [#allocation6], 64, 64, 4
    $region9: #{tpu_custom_call.1} parent=1 // pred_fallthru
      _
    // Predicated region
    $region10: #{tpu_custom_call.1} parent=1 // pred_check
      _
    $region11: #{tpu_custom_call.1} parent=1 // pred_check_branch
      %34 = sbr.rel (0) target = $region13
    $region12: #{tpu_custom_call.1} parent=1 // pred_region
      %s36 = ssub.s32 96, 96
      %37 = vsyncadd [#allocation6], %s36
      %s38 = sshll.u32 [#allocation7], 4
      %s39 = int_to_ptr.vmem [resolvable:$true] %s38
      %44 = dma.hbm_to_vmem [thread:$0]  %s2, 96, %s39, [#allocation6], 16, 16, 1
    $region13: #{tpu_custom_call.1} parent=1 // pred_fallthru
      _
    // Predicated region
    $region14: #{tpu_custom_call.1} parent=1 // pred_check
      _
    $region15: #{tpu_custom_call.1} parent=1 // pred_check_branch
      %46 = sbr.rel (0) target = $region17
    $region16: #{tpu_custom_call.1} parent=1 // pred_region
      %47 = dma.done [#allocation3], 128
    $region17: #{tpu_custom_call.1} parent=1 // pred_fallthru
      _
    // Predicated region
    $region18: #{tpu_custom_call.1} parent=1 // pred_check
      _
    $region19: #{tpu_custom_call.1} parent=1 // pred_check_branch
      %49 = sbr.rel (0) target = $region21
    $region20: #{tpu_custom_call.1} parent=1 // pred_region
      %50 = dma.done [#allocation6], 6144
    $region21: #{tpu_custom_call.1} parent=1 // pred_fallthru
      _
    // Predicated region
    $region22: #{tpu_custom_call.1} parent=1 // pred_check
      _
    $region23: #{tpu_custom_call.1} parent=1 // pred_check_branch
      %52 = sbr.rel (0) target = $region25
    $region24: #{tpu_custom_call.1} parent=1 // pred_region
      %53 = dma.done [#allocation6], 96
    $region25: #{tpu_custom_call.1} parent=1 // pred_fallthru
      _
    %v55 = vld [vmem:[#allocation2] sm:$0xff]
    %v56 = vpack.c.bf16 %v55, %v55
    %v57 = vld [vmem:[#allocation5] sm:$0xf]
    %v58 = vld [vmem:[#allocation5 + $0x4] sm:$0xf]
    %v59 = vld [vmem:[#allocation5 + $0x8] sm:$0xf]
    %v60 = vld [vmem:[#allocation5 + $0xc] sm:$0xf]
    %v61 = vld [vmem:[#allocation7] sm:$0x1]
    %v63 = vlaneseq
    %v64 = vshrl.u32 %v63, 7
    %v65 = vsub.s32 0, %v64
    %v66 = vrot.slane %v61, %v65
    %v72 = vunpack.c.l.b16 %v57
    %v73 = vunpack.c.l.b16 %v58
    %v74 = vunpack.c.l.b16 %v59
    %v75 = vunpack.c.l.b16 %v60
    %v76 = vpack.c.b16 %v73, %v72
    %v77 = vpack.c.b16 %v75, %v74
    %vm80 = vcmask 261120
    %v82 = vsel %vm80, %v56, 0
    %84 = vmatprep.subr.bf16.mxu0 0
    %85 = vmatpush1.bf16.msra.mxu0 0
    %86 = vmatprep.subr.bf16.mxu0 0
    %87 = vmatpush1.bf16.msra.mxu0 0
    %88 = vmatprep.subr.bf16.mxu0 0
    %89 = vmatpush1.bf16.msra.mxu0 0
    %90 = vmatprep.subr.bf16.mxu0 0
    %91 = vmatpush1.bf16.msra.mxu0 0
    %92 = vmatprep.subr.bf16.mxu0 0
    %93 = vmatpush1.bf16.msra.mxu0 0
    %94 = vmatprep.subr.bf16.mxu0 0
    %95 = vmatpush1.bf16.msra.mxu0 0
    %96 = vmatprep.subr.bf16.mxu0 0
    %97 = vmatpush1.bf16.msra.mxu0 %v77
    %98 = vmatprep.subr.bf16.mxu0 0
    %99 = vmatpush1.bf16.msra.mxu0 %v76
    %100 = vmatprep.subr.bf16.mxu0 0
    %101 = vmatpush2.bf16.msra.mxu0 0
    %102 = vmatprep.subr.bf16.mxu0 0
    %103 = vmatpush2.bf16.msra.mxu0 0
    %104 = vmatprep.subr.bf16.mxu0 0
    %105 = vmatpush2.bf16.msra.mxu0 0
    %106 = vmatprep.subr.bf16.mxu0 0
    %107 = vmatpush2.bf16.msra.mxu0 0
    %108 = vmatprep.subr.bf16.mxu0 0
    %109 = vmatpush2.bf16.msra.mxu0 0
    %110 = vmatprep.subr.bf16.mxu0 0
    %111 = vmatpush2.bf16.msra.mxu0 0
    %112 = vmatprep.subr.bf16.mxu0 0
    %113 = vmatpush2.bf16.msra.mxu0 0
    %114 = vmatprep.subr.bf16.mxu0 0
    %115 = vmatpush2.bf16.msra.mxu0 0
    %116 = vmatprep.mubr.bf16.mxu0 0
    %117 = vmatmul.mubr.bf16.gmra.mxu0 %v82
    %v118 = vpop.f32.mrf.mxu0
    %v119 = vadd.f32 %v66, %v118
    %v120 = vpop.f32.mrf.mxu0
    %v121 = vpop.f32.mrf.mxu0
    %v122 = vpop.f32.mrf.mxu0
    %123 = vdwg.mxu0
    %v124 = vmax.f32 %v119, 0.0
    %v125 = vpack.c.bf16 %v124, %v124
    %s126 = scalar_lea.vmem [#allocation5], 64
    %v127 = vld [vmem:[%s126] sm:$0xf]
    %v128 = vld [vmem:[%s126 + $0x4] sm:$0xf]
    %v129 = vld [vmem:[%s126 + $0x8] sm:$0xf]
    %v130 = vld [vmem:[%s126 + $0xc] sm:$0xf]
    %v131 = vld [vmem:[%s126 + $0x10] sm:$0xf]
    %v132 = vld [vmem:[%s126 + $0x14] sm:$0xf]
    %v133 = vld [vmem:[%s126 + $0x18] sm:$0xf]
    %v134 = vld [vmem:[%s126 + $0x1c] sm:$0xf]
    %v135 = vld [vmem:[%s126 + $0x20] sm:$0xf]
    %v136 = vld [vmem:[%s126 + $0x24] sm:$0xf]
    %v137 = vld [vmem:[%s126 + $0x28] sm:$0xf]
    %v138 = vld [vmem:[%s126 + $0x2c] sm:$0xf]
    %v139 = vld [vmem:[%s126 + $0x30] sm:$0xf]
    %v140 = vld [vmem:[%s126 + $0x34] sm:$0xf]
    %v141 = vld [vmem:[%s126 + $0x38] sm:$0xf]
    %v142 = vld [vmem:[%s126 + $0x3c] sm:$0xf]
    %s143 = scalar_lea.vmem [#allocation7], 1
    %v144 = vld [vmem:[%s143] sm:$0x1]
    %v146 = vlaneseq
    %v147 = vshrl.u32 %v146, 7
    %v148 = vsub.s32 0, %v147
    %v149 = vrot.slane %v144, %v148
    %v167 = vunpack.c.l.b16 %v127
    %v168 = vunpack.c.l.b16 %v128
    %v169 = vunpack.c.l.b16 %v129
    %v170 = vunpack.c.l.b16 %v130
    %v171 = vunpack.c.l.b16 %v131
    %v172 = vunpack.c.l.b16 %v132
    %v173 = vunpack.c.l.b16 %v133
    %v174 = vunpack.c.l.b16 %v134
    %v175 = vunpack.c.l.b16 %v135
    %v176 = vunpack.c.l.b16 %v136
    %v177 = vunpack.c.l.b16 %v137
    %v178 = vunpack.c.l.b16 %v138
    %v179 = vunpack.c.l.b16 %v139
    %v180 = vunpack.c.l.b16 %v140
    %v181 = vunpack.c.l.b16 %v141
    %v182 = vunpack.c.l.b16 %v142
    %v183 = vpack.c.b16 %v168, %v167
    %v184 = vpack.c.b16 %v170, %v169
    %v185 = vpack.c.b16 %v172, %v171
    %v186 = vpack.c.b16 %v174, %v173
    %v187 = vpack.c.b16 %v176, %v175
    %v188 = vpack.c.b16 %v178, %v177
    %v189 = vpack.c.b16 %v180, %v179
    %v190 = vpack.c.b16 %v182, %v181
    %199 = vmatprep.subr.bf16.mxu0 0
    %200 = vmatpush1.bf16.msra.mxu0 %v190
    %201 = vmatprep.subr.bf16.mxu0 0
    %202 = vmatpush1.bf16.msra.mxu0 %v189
    %203 = vmatprep.subr.bf16.mxu0 0
    %204 = vmatpush1.bf16.msra.mxu0 %v188
    %205 = vmatprep.subr.bf16.mxu0 0
    %206 = vmatpush1.bf16.msra.mxu0 %v187
    %207 = vmatprep.subr.bf16.mxu0 0
    %208 = vmatpush1.bf16.msra.mxu0 %v186
    %209 = vmatprep.subr.bf16.mxu0 0
    %210 = vmatpush1.bf16.msra.mxu0 %v185
    %211 = vmatprep.subr.bf16.mxu0 0
    %212 = vmatpush1.bf16.msra.mxu0 %v184
    %213 = vmatprep.subr.bf16.mxu0 0
    %214 = vmatpush1.bf16.msra.mxu0 %v183
    %215 = vmatprep.subr.bf16.mxu0 0
    %216 = vmatpush2.bf16.msra.mxu0 0
    %217 = vmatprep.subr.bf16.mxu0 0
    %218 = vmatpush2.bf16.msra.mxu0 0
    %219 = vmatprep.subr.bf16.mxu0 0
    %220 = vmatpush2.bf16.msra.mxu0 0
    %221 = vmatprep.subr.bf16.mxu0 0
    %222 = vmatpush2.bf16.msra.mxu0 0
    %223 = vmatprep.subr.bf16.mxu0 0
    %224 = vmatpush2.bf16.msra.mxu0 0
    %225 = vmatprep.subr.bf16.mxu0 0
    %226 = vmatpush2.bf16.msra.mxu0 0
    %227 = vmatprep.subr.bf16.mxu0 0
    %228 = vmatpush2.bf16.msra.mxu0 0
    %229 = vmatprep.subr.bf16.mxu0 0
    %230 = vmatpush2.bf16.msra.mxu0 0
    %231 = vmatprep.mubr.bf16.mxu0 0
    %232 = vmatmul.mubr.bf16.gmra.mxu0 %v125
    %v233 = vpop.f32.mrf.mxu0
    %v234 = vadd.f32 %v149, %v233
    %v235 = vpop.f32.mrf.mxu0
    %v236 = vpop.f32.mrf.mxu0
    %v237 = vpop.f32.mrf.mxu0
    %238 = vdwg.mxu0
    %v239 = vmax.f32 %v234, 0.0
    %v240 = vpack.c.bf16 %v239, %v239
    %s241 = scalar_lea.vmem [#allocation5], 128
    %v242 = vld [vmem:[%s241] sm:$0xf]
    %v243 = vld [vmem:[%s241 + $0x4] sm:$0xf]
    %v244 = vld [vmem:[%s241 + $0x8] sm:$0xf]
    %v245 = vld [vmem:[%s241 + $0xc] sm:$0xf]
    %v246 = vld [vmem:[%s241 + $0x10] sm:$0xf]
    %v247 = vld [vmem:[%s241 + $0x14] sm:$0xf]
    %v248 = vld [vmem:[%s241 + $0x18] sm:$0xf]
    %v249 = vld [vmem:[%s241 + $0x1c] sm:$0xf]
    %v250 = vld [vmem:[%s241 + $0x20] sm:$0xf]
    %v251 = vld [vmem:[%s241 + $0x24] sm:$0xf]
    %v252 = vld [vmem:[%s241 + $0x28] sm:$0xf]
    %v253 = vld [vmem:[%s241 + $0x2c] sm:$0xf]
    %v254 = vld [vmem:[%s241 + $0x30] sm:$0xf]
    %v255 = vld [vmem:[%s241 + $0x34] sm:$0xf]
    %v256 = vld [vmem:[%s241 + $0x38] sm:$0xf]
    %v257 = vld [vmem:[%s241 + $0x3c] sm:$0xf]
    %s258 = scalar_lea.vmem [#allocation7], 2
    %v259 = vld [vmem:[%s258] sm:$0x1]
    %v261 = vlaneseq
    %v262 = vshrl.u32 %v261, 7
    %v263 = vsub.s32 0, %v262
    %v264 = vrot.slane %v259, %v263
    %v282 = vunpack.c.l.b16 %v242
    %v283 = vunpack.c.l.b16 %v243
    %v284 = vunpack.c.l.b16 %v244
    %v285 = vunpack.c.l.b16 %v245
    %v286 = vunpack.c.l.b16 %v246
    %v287 = vunpack.c.l.b16 %v247
    %v288 = vunpack.c.l.b16 %v248
    %v289 = vunpack.c.l.b16 %v249
    %v290 = vunpack.c.l.b16 %v250
    %v291 = vunpack.c.l.b16 %v251
    %v292 = vunpack.c.l.b16 %v252
    %v293 = vunpack.c.l.b16 %v253
    %v294 = vunpack.c.l.b16 %v254
    %v295 = vunpack.c.l.b16 %v255
    %v296 = vunpack.c.l.b16 %v256
    %v297 = vunpack.c.l.b16 %v257
    %v298 = vpack.c.b16 %v283, %v282
    %v299 = vpack.c.b16 %v285, %v284
    %v300 = vpack.c.b16 %v287, %v286
    %v301 = vpack.c.b16 %v289, %v288
    %v302 = vpack.c.b16 %v291, %v290
    %v303 = vpack.c.b16 %v293, %v292
    %v304 = vpack.c.b16 %v295, %v294
    %v305 = vpack.c.b16 %v297, %v296
    %314 = vmatprep.subr.bf16.mxu0 0
    %315 = vmatpush1.bf16.msra.mxu0 %v305
    %316 = vmatprep.subr.bf16.mxu0 0
    %317 = vmatpush1.bf16.msra.mxu0 %v304
    %318 = vmatprep.subr.bf16.mxu0 0
    %319 = vmatpush1.bf16.msra.mxu0 %v303
    %320 = vmatprep.subr.bf16.mxu0 0
    %321 = vmatpush1.bf16.msra.mxu0 %v302
    %322 = vmatprep.subr.bf16.mxu0 0
    %323 = vmatpush1.bf16.msra.mxu0 %v301
    %324 = vmatprep.subr.bf16.mxu0 0
    %325 = vmatpush1.bf16.msra.mxu0 %v300
    %326 = vmatprep.subr.bf16.mxu0 0
    %327 = vmatpush1.bf16.msra.mxu0 %v299
    %328 = vmatprep.subr.bf16.mxu0 0
    %329 = vmatpush1.bf16.msra.mxu0 %v298
    %330 = vmatprep.subr.bf16.mxu0 0
    %331 = vmatpush2.bf16.msra.mxu0 0
    %332 = vmatprep.subr.bf16.mxu0 0
    %333 = vmatpush2.bf16.msra.mxu0 0
    %334 = vmatprep.subr.bf16.mxu0 0
    %335 = vmatpush2.bf16.msra.mxu0 0
    %336 = vmatprep.subr.bf16.mxu0 0
    %337 = vmatpush2.bf16.msra.mxu0 0
    %338 = vmatprep.subr.bf16.mxu0 0
    %339 = vmatpush2.bf16.msra.mxu0 0
    %340 = vmatprep.subr.bf16.mxu0 0
    %341 = vmatpush2.bf16.msra.mxu0 0
    %342 = vmatprep.subr.bf16.mxu0 0
    %343 = vmatpush2.bf16.msra.mxu0 0
    %344 = vmatprep.subr.bf16.mxu0 0
    %345 = vmatpush2.bf16.msra.mxu0 0
    %346 = vmatprep.mubr.bf16.mxu0 0
    %347 = vmatmul.mubr.bf16.gmra.mxu0 %v240
    %v348 = vpop.f32.mrf.mxu0
    %v349 = vadd.f32 %v264, %v348
    %v350 = vpop.f32.mrf.mxu0
    %v351 = vpop.f32.mrf.mxu0
    %v352 = vpop.f32.mrf.mxu0
    %353 = vdwg.mxu0
    %v354 = vmax.f32 %v349, 0.0
    %v355 = vpack.c.bf16 %v354, %v354
    %s356 = scalar_lea.vmem [#allocation5], 192
    %v357 = vld [vmem:[%s356] sm:$0xf]
    %v358 = vld [vmem:[%s356 + $0x4] sm:$0xf]
    %v359 = vld [vmem:[%s356 + $0x8] sm:$0xf]
    %v360 = vld [vmem:[%s356 + $0xc] sm:$0xf]
    %v361 = vld [vmem:[%s356 + $0x10] sm:$0xf]
    %v362 = vld [vmem:[%s356 + $0x14] sm:$0xf]
    %v363 = vld [vmem:[%s356 + $0x18] sm:$0xf]
    %v364 = vld [vmem:[%s356 + $0x1c] sm:$0xf]
    %v365 = vld [vmem:[%s356 + $0x20] sm:$0xf]
    %v366 = vld [vmem:[%s356 + $0x24] sm:$0xf]
    %v367 = vld [vmem:[%s356 + $0x28] sm:$0xf]
    %v368 = vld [vmem:[%s356 + $0x2c] sm:$0xf]
    %v369 = vld [vmem:[%s356 + $0x30] sm:$0xf]
    %v370 = vld [vmem:[%s356 + $0x34] sm:$0xf]
    %v371 = vld [vmem:[%s356 + $0x38] sm:$0xf]
    %v372 = vld [vmem:[%s356 + $0x3c] sm:$0xf]
    %s373 = scalar_lea.vmem [#allocation7], 3
    %v374 = vld [vmem:[%s373] sm:$0x1]
    %v376 = vlaneseq
    %v377 = vshrl.u32 %v376, 7
    %v378 = vsub.s32 0, %v377
    %v379 = vrot.slane %v374, %v378
    %v397 = vunpack.c.l.b16 %v357
    %v398 = vunpack.c.l.b16 %v358
    %v399 = vunpack.c.l.b16 %v359
    %v400 = vunpack.c.l.b16 %v360
    %v401 = vunpack.c.l.b16 %v361
    %v402 = vunpack.c.l.b16 %v362
    %v403 = vunpack.c.l.b16 %v363
    %v404 = vunpack.c.l.b16 %v364
    %v405 = vunpack.c.l.b16 %v365
    %v406 = vunpack.c.l.b16 %v366
    %v407 = vunpack.c.l.b16 %v367
    %v408 = vunpack.c.l.b16 %v368
    %v409 = vunpack.c.l.b16 %v369
    %v410 = vunpack.c.l.b16 %v370
    %v411 = vunpack.c.l.b16 %v371
    %v412 = vunpack.c.l.b16 %v372
    %v413 = vpack.c.b16 %v398, %v397
    %v414 = vpack.c.b16 %v400, %v399
    %v415 = vpack.c.b16 %v402, %v401
    %v416 = vpack.c.b16 %v404, %v403
    %v417 = vpack.c.b16 %v406, %v405
    %v418 = vpack.c.b16 %v408, %v407
    %v419 = vpack.c.b16 %v410, %v409
    %v420 = vpack.c.b16 %v412, %v411
    %429 = vmatprep.subr.bf16.mxu0 0
    %430 = vmatpush1.bf16.msra.mxu0 %v420
    %431 = vmatprep.subr.bf16.mxu0 0
    %432 = vmatpush1.bf16.msra.mxu0 %v419
    %433 = vmatprep.subr.bf16.mxu0 0
    %434 = vmatpush1.bf16.msra.mxu0 %v418
    %435 = vmatprep.subr.bf16.mxu0 0
    %436 = vmatpush1.bf16.msra.mxu0 %v417
    %437 = vmatprep.subr.bf16.mxu0 0
    %438 = vmatpush1.bf16.msra.mxu0 %v416
    %439 = vmatprep.subr.bf16.mxu0 0
    %440 = vmatpush1.bf16.msra.mxu0 %v415
    %441 = vmatprep.subr.bf16.mxu0 0
    %442 = vmatpush1.bf16.msra.mxu0 %v414
    %443 = vmatprep.subr.bf16.mxu0 0
    %444 = vmatpush1.bf16.msra.mxu0 %v413
    %445 = vmatprep.subr.bf16.mxu0 0
    %446 = vmatpush2.bf16.msra.mxu0 0
    %447 = vmatprep.subr.bf16.mxu0 0
    %448 = vmatpush2.bf16.msra.mxu0 0
    %449 = vmatprep.subr.bf16.mxu0 0
    %450 = vmatpush2.bf16.msra.mxu0 0
    %451 = vmatprep.subr.bf16.mxu0 0
    %452 = vmatpush2.bf16.msra.mxu0 0
    %453 = vmatprep.subr.bf16.mxu0 0
    %454 = vmatpush2.bf16.msra.mxu0 0
    %455 = vmatprep.subr.bf16.mxu0 0
    %456 = vmatpush2.bf16.msra.mxu0 0
    %457 = vmatprep.subr.bf16.mxu0 0
    %458 = vmatpush2.bf16.msra.mxu0 0
    %459 = vmatprep.subr.bf16.mxu0 0
    %460 = vmatpush2.bf16.msra.mxu0 0
    %461 = vmatprep.mubr.bf16.mxu0 0
    %462 = vmatmul.mubr.bf16.gmra.mxu0 %v355
    %v463 = vpop.f32.mrf.mxu0
    %v464 = vadd.f32 %v379, %v463
    %v465 = vpop.f32.mrf.mxu0
    %v466 = vpop.f32.mrf.mxu0
    %v467 = vpop.f32.mrf.mxu0
    %468 = vdwg.mxu0
    %v469 = vmax.f32 %v464, 0.0
    %v470 = vpack.c.bf16 %v469, %v469
    %s471 = scalar_lea.vmem [#allocation5], 256
    %v472 = vld [vmem:[%s471] sm:$0xf]
    %v473 = vld [vmem:[%s471 + $0x4] sm:$0xf]
    %v474 = vld [vmem:[%s471 + $0x8] sm:$0xf]
    %v475 = vld [vmem:[%s471 + $0xc] sm:$0xf]
    %v476 = vld [vmem:[%s471 + $0x10] sm:$0xf]
    %v477 = vld [vmem:[%s471 + $0x14] sm:$0xf]
    %v478 = vld [vmem:[%s471 + $0x18] sm:$0xf]
    %v479 = vld [vmem:[%s471 + $0x1c] sm:$0xf]
    %v480 = vld [vmem:[%s471 + $0x20] sm:$0xf]
    %v481 = vld [vmem:[%s471 + $0x24] sm:$0xf]
    %v482 = vld [vmem:[%s471 + $0x28] sm:$0xf]
    %v483 = vld [vmem:[%s471 + $0x2c] sm:$0xf]
    %v484 = vld [vmem:[%s471 + $0x30] sm:$0xf]
    %v485 = vld [vmem:[%s471 + $0x34] sm:$0xf]
    %v486 = vld [vmem:[%s471 + $0x38] sm:$0xf]
    %v487 = vld [vmem:[%s471 + $0x3c] sm:$0xf]
    %s488 = scalar_lea.vmem [#allocation7], 4
    %v489 = vld [vmem:[%s488] sm:$0x1]
    %v491 = vlaneseq
    %v492 = vshrl.u32 %v491, 7
    %v493 = vsub.s32 0, %v492
    %v494 = vrot.slane %v489, %v493
    %v512 = vunpack.c.l.b16 %v472
    %v513 = vunpack.c.l.b16 %v473
    %v514 = vunpack.c.l.b16 %v474
    %v515 = vunpack.c.l.b16 %v475
    %v516 = vunpack.c.l.b16 %v476
    %v517 = vunpack.c.l.b16 %v477
    %v518 = vunpack.c.l.b16 %v478
    %v519 = vunpack.c.l.b16 %v479
    %v520 = vunpack.c.l.b16 %v480
    %v521 = vunpack.c.l.b16 %v481
    %v522 = vunpack.c.l.b16 %v482
    %v523 = vunpack.c.l.b16 %v483
    %v524 = vunpack.c.l.b16 %v484
    %v525 = vunpack.c.l.b16 %v485
    %v526 = vunpack.c.l.b16 %v486
    %v527 = vunpack.c.l.b16 %v487
    %v528 = vpack.c.b16 %v513, %v512
    %v529 = vpack.c.b16 %v515, %v514
    %v530 = vpack.c.b16 %v517, %v516
    %v531 = vpack.c.b16 %v519, %v518
    %v532 = vpack.c.b16 %v521, %v520
    %v533 = vpack.c.b16 %v523, %v522
    %v534 = vpack.c.b16 %v525, %v524
    %v535 = vpack.c.b16 %v527, %v526
    %544 = vmatprep.subr.bf16.mxu0 0
    %545 = vmatpush1.bf16.msra.mxu0 %v535
    %546 = vmatprep.subr.bf16.mxu0 0
    %547 = vmatpush1.bf16.msra.mxu0 %v534
    %548 = vmatprep.subr.bf16.mxu0 0
    %549 = vmatpush1.bf16.msra.mxu0 %v533
    %550 = vmatprep.subr.bf16.mxu0 0
    %551 = vmatpush1.bf16.msra.mxu0 %v532
    %552 = vmatprep.subr.bf16.mxu0 0
    %553 = vmatpush1.bf16.msra.mxu0 %v531
    %554 = vmatprep.subr.bf16.mxu0 0
    %555 = vmatpush1.bf16.msra.mxu0 %v530
    %556 = vmatprep.subr.bf16.mxu0 0
    %557 = vmatpush1.bf16.msra.mxu0 %v529
    %558 = vmatprep.subr.bf16.mxu0 0
    %559 = vmatpush1.bf16.msra.mxu0 %v528
    %560 = vmatprep.subr.bf16.mxu0 0
    %561 = vmatpush2.bf16.msra.mxu0 0
    %562 = vmatprep.subr.bf16.mxu0 0
    %563 = vmatpush2.bf16.msra.mxu0 0
    %564 = vmatprep.subr.bf16.mxu0 0
    %565 = vmatpush2.bf16.msra.mxu0 0
    %566 = vmatprep.subr.bf16.mxu0 0
    %567 = vmatpush2.bf16.msra.mxu0 0
    %568 = vmatprep.subr.bf16.mxu0 0
    %569 = vmatpush2.bf16.msra.mxu0 0
    %570 = vmatprep.subr.bf16.mxu0 0
    %571 = vmatpush2.bf16.msra.mxu0 0
    %572 = vmatprep.subr.bf16.mxu0 0
    %573 = vmatpush2.bf16.msra.mxu0 0
    %574 = vmatprep.subr.bf16.mxu0 0
    %575 = vmatpush2.bf16.msra.mxu0 0
    %576 = vmatprep.mubr.bf16.mxu0 0
    %577 = vmatmul.mubr.bf16.gmra.mxu0 %v470
    %v578 = vpop.f32.mrf.mxu0
    %v579 = vadd.f32 %v494, %v578
    %v580 = vpop.f32.mrf.mxu0
    %v581 = vpop.f32.mrf.mxu0
    %v582 = vpop.f32.mrf.mxu0
    %583 = vdwg.mxu0
    %v584 = vmax.f32 %v579, 0.0
    %v585 = vpack.c.bf16 %v584, %v584
    %s586 = scalar_lea.vmem [#allocation5], 320
    %v587 = vld [vmem:[%s586] sm:$0xf]
    %v588 = vld [vmem:[%s586 + $0x4] sm:$0xf]
    %v589 = vld [vmem:[%s586 + $0x8] sm:$0xf]
    %v590 = vld [vmem:[%s586 + $0xc] sm:$0xf]
    %v591 = vld [vmem:[%s586 + $0x10] sm:$0xf]
    %v592 = vld [vmem:[%s586 + $0x14] sm:$0xf]
    %v593 = vld [vmem:[%s586 + $0x18] sm:$0xf]
    %v594 = vld [vmem:[%s586 + $0x1c] sm:$0xf]
    %v595 = vld [vmem:[%s586 + $0x20] sm:$0xf]
    %v596 = vld [vmem:[%s586 + $0x24] sm:$0xf]
    %v597 = vld [vmem:[%s586 + $0x28] sm:$0xf]
    %v598 = vld [vmem:[%s586 + $0x2c] sm:$0xf]
    %v599 = vld [vmem:[%s586 + $0x30] sm:$0xf]
    %v600 = vld [vmem:[%s586 + $0x34] sm:$0xf]
    %v601 = vld [vmem:[%s586 + $0x38] sm:$0xf]
    %v602 = vld [vmem:[%s586 + $0x3c] sm:$0xf]
    %s603 = scalar_lea.vmem [#allocation7], 5
    %v604 = vld [vmem:[%s603] sm:$0x1]
    %v606 = vlaneseq
    %v607 = vshrl.u32 %v606, 7
    %v608 = vsub.s32 0, %v607
    %v609 = vrot.slane %v604, %v608
    %v627 = vunpack.c.l.b16 %v587
    %v628 = vunpack.c.l.b16 %v588
    %v629 = vunpack.c.l.b16 %v589
    %v630 = vunpack.c.l.b16 %v590
    %v631 = vunpack.c.l.b16 %v591
    %v632 = vunpack.c.l.b16 %v592
    %v633 = vunpack.c.l.b16 %v593
    %v634 = vunpack.c.l.b16 %v594
    %v635 = vunpack.c.l.b16 %v595
    %v636 = vunpack.c.l.b16 %v596
    %v637 = vunpack.c.l.b16 %v597
    %v638 = vunpack.c.l.b16 %v598
    %v639 = vunpack.c.l.b16 %v599
    %v640 = vunpack.c.l.b16 %v600
    %v641 = vunpack.c.l.b16 %v601
    %v642 = vunpack.c.l.b16 %v602
    %v643 = vpack.c.b16 %v628, %v627
    %v644 = vpack.c.b16 %v630, %v629
    %v645 = vpack.c.b16 %v632, %v631
    %v646 = vpack.c.b16 %v634, %v633
    %v647 = vpack.c.b16 %v636, %v635
    %v648 = vpack.c.b16 %v638, %v637
    %v649 = vpack.c.b16 %v640, %v639
    %v650 = vpack.c.b16 %v642, %v641
    %659 = vmatprep.subr.bf16.mxu0 0
    %660 = vmatpush1.bf16.msra.mxu0 %v650
    %661 = vmatprep.subr.bf16.mxu0 0
    %662 = vmatpush1.bf16.msra.mxu0 %v649
    %663 = vmatprep.subr.bf16.mxu0 0
    %664 = vmatpush1.bf16.msra.mxu0 %v648
    %665 = vmatprep.subr.bf16.mxu0 0
    %666 = vmatpush1.bf16.msra.mxu0 %v647
    %667 = vmatprep.subr.bf16.mxu0 0
    %668 = vmatpush1.bf16.msra.mxu0 %v646
    %669 = vmatprep.subr.bf16.mxu0 0
    %670 = vmatpush1.bf16.msra.mxu0 %v645
    %671 = vmatprep.subr.bf16.mxu0 0
    %672 = vmatpush1.bf16.msra.mxu0 %v644
    %673 = vmatprep.subr.bf16.mxu0 0
    %674 = vmatpush1.bf16.msra.mxu0 %v643
    %675 = vmatprep.subr.bf16.mxu0 0
    %676 = vmatpush2.bf16.msra.mxu0 0
    %677 = vmatprep.subr.bf16.mxu0 0
    %678 = vmatpush2.bf16.msra.mxu0 0
    %679 = vmatprep.subr.bf16.mxu0 0
    %680 = vmatpush2.bf16.msra.mxu0 0
    %681 = vmatprep.subr.bf16.mxu0 0
    %682 = vmatpush2.bf16.msra.mxu0 0
    %683 = vmatprep.subr.bf16.mxu0 0
    %684 = vmatpush2.bf16.msra.mxu0 0
    %685 = vmatprep.subr.bf16.mxu0 0
    %686 = vmatpush2.bf16.msra.mxu0 0
    %687 = vmatprep.subr.bf16.mxu0 0
    %688 = vmatpush2.bf16.msra.mxu0 0
    %689 = vmatprep.subr.bf16.mxu0 0
    %690 = vmatpush2.bf16.msra.mxu0 0
    %691 = vmatprep.mubr.bf16.mxu0 0
    %692 = vmatmul.mubr.bf16.gmra.mxu0 %v585
    %v693 = vpop.f32.mrf.mxu0
    %v694 = vadd.f32 %v609, %v693
    %v695 = vpop.f32.mrf.mxu0
    %v696 = vpop.f32.mrf.mxu0
    %v697 = vpop.f32.mrf.mxu0
    %698 = vdwg.mxu0
    %699 = vst [vmem:[#allocation8] sm:$0xff] %v694
    // Predicated region
    $region26: #{tpu_custom_call.1} parent=1 // pred_check
      _
    $region27: #{tpu_custom_call.1} parent=1 // pred_check_branch
      %701 = sbr.rel (0) target = $region29
    $region28: #{tpu_custom_call.1} parent=1 // pred_region
      %s703 = ssub.s32 128, 128
      %704 = vsyncadd [#allocation4], %s703
      %s706 = sshll.u32 [#allocation8], 4
      %s707 = int_to_ptr.vmem [resolvable:$true] %s706
      %709 = dma.vmem_to_hbm [thread:$0]  %s707, 128, %s3, [#allocation4]
    $region29: #{tpu_custom_call.1} parent=1 // pred_fallthru
      _
    // Predicated region
    $region30: #{tpu_custom_call.1} parent=1 // pred_check
      _
    $region31: #{tpu_custom_call.1} parent=1 // pred_check_branch
      %711 = sbr.rel (0) target = $region33
    $region32: #{tpu_custom_call.1} parent=1 // pred_region
      %712 = dma.done [#allocation4], 128
    $region33: #{tpu_custom_call.1} parent=1 // pred_fallthru
      _
    %713 = vsyncpa [#allocation3], 1
    %714 = vsyncpa [#allocation6], 1
    %715 = vsyncpa [#allocation4], 1

</llo_original>
